<compile_context>
chip_gen: v5e
topology: v5e:2x2
jax: 0.10.0
libtpu: 0.0.40
codegen_flags: <defaults>
</compile_context>

<pallas_src>
import jax
import jax.numpy as jnp
from jax.experimental import pallas as pl
from jax.experimental.pallas import tpu as pltpu

CLASS_NUM = 17
EPSILON = 0.1

_LANES = 128
_SUBLANES = 8
_NUM_ACC = 4                          # independent (8,128) accumulators per core
_ACC_ROWS = _NUM_ACC * _SUBLANES      # 32 rows resident per core
_MAX_TILE_R = 4096                    # 4096 x 128 x 4B = 2 MiB per f32 input block
_SUBCHUNK_R = 512                     # in-kernel compute chunk (256 KiB f32 temps)
_VMEM_LIMIT_BYTES = 32 * 1024 * 1024  # covers 2 in x 2 buf x 2 MiB + temporaries


def _round_up(x, m):
    return ((x + m - 1) // m) * m


def _tensorcore_splits(num_blocks):
    """(num_splits, leading-axis semantics): 2-way CORE_PARALLEL only on
    multi-TensorCore chips (v7x); 1-way on single-TC v5e/v6e."""
    try:
        kind = jax.devices()[0].device_kind.lower()
    except Exception:
        kind = ""
    multi_tc = ("v7" in kind) or ("7x" in kind)
    if multi_tc and num_blocks >= 2:
        return 2, pltpu.CORE_PARALLEL
    return 1, pltpu.ARBITRARY


def _make_kl_kernel(tile_r, subchunk, blocks_per_core, valid_rows):
    """KL partial-sum kernel for grid = (num_splits, blocks_per_core)."""
    n_chunks = tile_r // subchunk
    fold = subchunk // _ACC_ROWS    # rows folded into each accumulator row

    def accumulate(z_ref, p_ref, o_ref, row0, masked):
        def chunk_sum(start):
            z = z_ref[pl.ds(start, subchunk), :].astype(jnp.float32)
            p = p_ref[pl.ds(start, subchunk), :].astype(jnp.float32)
            valid = p > 0.0                              # 0 * log(0) := 0
            if masked:
                row_ids = (row0 + start) + jax.lax.broadcasted_iota(
                    jnp.int32, (subchunk, _LANES), 0)
                valid = valid & (row_ids < valid_rows)
            safe_p = jnp.where(valid, p, 1.0)            # keep log() off 0/garbage
            # NOTE: log stays f32 for exactness; switch to a bf16 log only if a
            # bundle dump shows the EUP slot binding on v6e/v7x.
            pw = jnp.where(valid, p * (jnp.log(safe_p) - z), 0.0)
            # Fold (subchunk,128) -> (32,128): 4 independent (8,128) partial
            # accumulators, pure VPU vreg adds (no cross-lane work in-kernel).
            return jnp.sum(pw.reshape(fold, _ACC_ROWS, _LANES), axis=0)

        if n_chunks == 1:
            o_ref[...] += chunk_sum(0)
        else:
            def body(j, acc):
                start = pl.multiple_of(j * subchunk, subchunk)
                return acc + chunk_sum(start)
            acc = jax.lax.fori_loop(
                0, n_chunks, body, jnp.zeros((_ACC_ROWS, _LANES), jnp.float32))
            o_ref[...] += acc

    def kernel(z_ref, p_ref, o_ref):
        c = pl.program_id(0)
        i = pl.program_id(1)

        # Zero this core's resident accumulators at the start of its sweep.
        @pl.when(i == 0)
        def _():
            o_ref[...] = jnp.zeros_like(o_ref)

        global_block = c * blocks_per_core + i
        row0 = global_block * tile_r
        fully_valid = (row0 + tile_r) <= valid_rows

        # Hot path: interior blocks need no row mask (drops iota/cmp/and VALU
        # work from every full tile).
        @pl.when(fully_valid)
        def _():
            accumulate(z_ref, p_ref, o_ref, row0, masked=False)

        # Cold path: final partial block and clamped out-of-range duplicates
        # (their unclamped row ids are all >= valid_rows -> contribute zero).
        @pl.when(jnp.logical_not(fully_valid))
        def _():
            accumulate(z_ref, p_ref, o_ref, row0, masked=True)

    return kernel


def smoothing_loss(input_z, target_p, class_num=CLASS_NUM, epsilon=EPSILON):
    """Pallas implementation of SmoothingLoss.forward.

    soft_z (softmax over dim=1) and soft_p (label smoothing) are computed by the
    PyTorch module but never used in the returned value, so they are not
    materialized here (pure dead code in the reference).
    """
    del class_num, epsilon  # only used by the dead-code branch of the reference
    assert input_z.shape == target_p.shape
    n = int(input_z.size)
    assert n > 0

    # Keep original dtype; the kernel upcasts on the VPU (hidden under DMA).
    z_flat = input_z.reshape(-1)
    p_flat = target_p.reshape(-1)

    if n % _LANES == 0:
        rows = n // _LANES            # zero-copy lane-dense reshape (common path)
    else:
        # Awkward sizes only: pad to a full 128-lane row (one extra HBM pass).
        # Padded target entries are 0 so they contribute exactly 0.
        # TODO(synk): a fully copy-free path for n % 128 != 0 needs manual DMA
        # from a 1-D HBM ref; not worth it for a <128-element ragged tail.
        padded = pl.cdiv(n, _LANES) * _LANES
        pad = padded - n
        z_flat = jnp.pad(z_flat, (0, pad))
        p_flat = jnp.pad(p_flat, (0, pad))
        rows = padded // _LANES

    z2d = z_flat.reshape(rows, _LANES)
    p2d = p_flat.reshape(rows, _LANES)

    # Tile selection: large DMA blocks, always a multiple of the in-kernel
    # sub-chunk and of the 32-row accumulator fold (ragged tails are masked).
    if rows >= _MAX_TILE_R:
        tile_r = _MAX_TILE_R
    elif rows > _SUBCHUNK_R:
        tile_r = _round_up(rows, _SUBCHUNK_R)
    else:
        tile_r = _round_up(rows, _ACC_ROWS)
    subchunk = min(_SUBCHUNK_R, tile_r)

    num_blocks = pl.cdiv(rows, tile_r)
    num_splits, core_semantics = _tensorcore_splits(num_blocks)
    blocks_per_core = pl.cdiv(num_blocks, num_splits)

    def in_index_map(c, i):
        # Clamp fully out-of-range blocks (odd block counts across the core
        # split) to the last valid block; the kernel masks them to zero.
        return (jnp.minimum(c * blocks_per_core + i, num_blocks - 1), 0)

    kernel = _make_kl_kernel(tile_r, subchunk, blocks_per_core, rows)

    partials = pl.pallas_call(
        kernel,
        out_shape=jax.ShapeDtypeStruct((num_splits * _ACC_ROWS, _LANES),
                                       jnp.float32),
        grid_spec=pltpu.PrefetchScalarGridSpec(
            num_scalar_prefetch=0,
            grid=(num_splits, blocks_per_core),
            in_specs=[
                pl.BlockSpec((tile_r, _LANES), in_index_map),
                pl.BlockSpec((tile_r, _LANES), in_index_map),
            ],
            out_specs=pl.BlockSpec((_ACC_ROWS, _LANES), lambda c, i: (c, 0)),
        ),
        compiler_params=pltpu.CompilerParams(
            dimension_semantics=(core_semantics, pltpu.ARBITRARY),
            vmem_limit_bytes=_VMEM_LIMIT_BYTES),
    )(z2d, p2d)

    # F.kl_div default reduction='mean' divides by the TOTAL number of elements.
    return jnp.sum(partials) / jnp.float32(n)


def _reference(input_z, target_p):
    p = target_p.astype(jnp.float32)
    z = input_z.astype(jnp.float32)
    pw = jnp.where(p > 0, p * (jnp.log(jnp.where(p > 0, p, 1.0)) - z), 0.0)
    return jnp.mean(pw)


if __name__ == "__main__":
    key = jax.random.PRNGKey(0)
    k1, k2 = jax.random.split(key)

    B, C, H, W = 2, CLASS_NUM, 16, 16          # NCHW, C = class_num = 17
    input_z = jax.random.normal(k1, (B, C, H, W), dtype=jnp.float32)
    # target_p: valid probability distribution over the class (dim=1) axis
    target_logits = jax.random.normal(k2, (B, C, H, W), dtype=jnp.float32)
    target_p = jax.nn.softmax(target_logits, axis=1)

    out = jax.block_until_ready(smoothing_loss(input_z, target_p))
    ref = jax.block_until_ready(_reference(input_z, target_p))
    assert jnp.allclose(out, ref, rtol=1e-5, atol=1e-6), (out, ref)

    print("KERNEL_OK")
</pallas_src>

<mosaic_0001>
module attributes {stable_mosaic.version = 11 : i64} {
  func.func @kernel(%arg0: i32, %arg1: i32, %arg2: memref<96x128xf32, #tpu.memory_space<vmem>>, %arg3: memref<96x128xf32, #tpu.memory_space<vmem>>, %arg4: memref<32x128xf32, #tpu.memory_space<vmem>>) attributes {dimension_semantics = [#tpu.dimension_semantics<arbitrary>, #tpu.dimension_semantics<arbitrary>], iteration_bounds = array<i64: 1, 1>, scalar_prefetch = 0 : i64, scratch_operands = 0 : i64, tpu.core_type = #tpu.core_type<tc>, window_params = [{transform_indices = @transform_0, window_bounds = array<i64: 96, 128>}, {transform_indices = @transform_1, window_bounds = array<i64: 96, 128>}, {transform_indices = @transform_2, window_bounds = array<i64: 32, 128>}]} {
    %c0_i32 = arith.constant 0 : i32
    %0 = arith.cmpi eq, %arg1, %c0_i32 : i32
    %1 = arith.extui %0 : i1 to i32
    %c0_i32_0 = arith.constant 0 : i32
    %2 = arith.cmpi ne, %1, %c0_i32_0 : i32
    scf.if %2 {
      %cst = arith.constant 0.000000e+00 : f32
      %13 = vector.broadcast %cst : f32 to vector<32x128xf32>
      %c0 = arith.constant 0 : index
      %c0_4 = arith.constant 0 : index
      %14 = vector.load %arg4[%c0, %c0_4] : memref<32x128xf32, #tpu.memory_space<vmem>>, vector<32x128xf32>
      tpu.vector_store %arg4[%c0, %c0_4], %13 {strides = array<i32>} : memref<32x128xf32, #tpu.memory_space<vmem>>, vector<32x128xf32>,
    } else {
    }
    %c1_i32 = arith.constant 1 : i32
    %3 = arith.muli %arg0, %c1_i32 : i32
    %4 = arith.addi %3, %arg1 : i32
    %c96_i32 = arith.constant 96 : i32
    %5 = arith.muli %4, %c96_i32 : i32
    %c96_i32_1 = arith.constant 96 : i32
    %6 = arith.addi %5, %c96_i32_1 : i32
    %c68_i32 = arith.constant 68 : i32
    %7 = arith.cmpi sle, %6, %c68_i32 : i32
    %8 = arith.extui %7 : i1 to i32
    %c0_i32_2 = arith.constant 0 : i32
    %9 = arith.cmpi ne, %8, %c0_i32_2 : i32
    scf.if %9 {
      %c0 = arith.constant 0 : index
      %c0_4 = arith.constant 0 : index
      %13 = vector.load %arg4[%c0, %c0_4] : memref<32x128xf32, #tpu.memory_space<vmem>>, vector<32x128xf32>
      %c0_5 = arith.constant 0 : index
      %c0_6 = arith.constant 0 : index
      %14 = vector.load %arg2[%c0_5, %c0_6] : memref<96x128xf32, #tpu.memory_space<vmem>>, vector<96x128xf32>
      %c0_7 = arith.constant 0 : index
      %c0_8 = arith.constant 0 : index
      %15 = vector.load %arg3[%c0_7, %c0_8] : memref<96x128xf32, #tpu.memory_space<vmem>>, vector<96x128xf32>
      %cst = arith.constant 0.000000e+00 : f32
      %16 = vector.broadcast %cst : f32 to vector<96x128xf32>
      %17 = arith.cmpf ogt, %15, %16 : vector<96x128xf32>
      %cst_9 = arith.constant 1.000000e+00 : f32
      %18 = vector.broadcast %cst_9 : f32 to vector<96x128xf32>
      %19 = arith.select %17, %15, %18 : vector<96x128xi1>, vector<96x128xf32>
      %20 = math.log %19 : vector<96x128xf32>
      %21 = arith.subf %20, %14 : vector<96x128xf32>
      %22 = arith.mulf %15, %21 : vector<96x128xf32>
      %cst_10 = arith.constant 0.000000e+00 : f32
      %23 = vector.broadcast %cst_10 : f32 to vector<96x128xf32>
      %24 = arith.select %17, %22, %23 : vector<96x128xi1>, vector<96x128xf32>
      %25 = vector.shape_cast %24 : vector<96x128xf32> to vector<3x32x128xf32>
      %cst_11 = arith.constant dense<0.000000e+00> : vector<32x128xf32>
      %26 = vector.multi_reduction <add>, %25, %cst_11 [0] : vector<3x32x128xf32> to vector<32x128xf32>
      %27 = arith.addf %13, %26 : vector<32x128xf32>
      %c0_12 = arith.constant 0 : index
      %c0_13 = arith.constant 0 : index
      %28 = vector.load %arg4[%c0_12, %c0_13] : memref<32x128xf32, #tpu.memory_space<vmem>>, vector<32x128xf32>
      tpu.vector_store %arg4[%c0_12, %c0_13], %27 {strides = array<i32>} : memref<32x128xf32, #tpu.memory_space<vmem>>, vector<32x128xf32>,
    } else {
    }
    %true = arith.constant true
    %10 = arith.xori %7, %true : i1
    %11 = arith.extui %10 : i1 to i32
    %c0_i32_3 = arith.constant 0 : i32
    %12 = arith.cmpi ne, %11, %c0_i32_3 : i32
    scf.if %12 {
      %c0 = arith.constant 0 : index
      %c0_4 = arith.constant 0 : index
      %13 = vector.load %arg4[%c0, %c0_4] : memref<32x128xf32, #tpu.memory_space<vmem>>, vector<32x128xf32>
      %c0_5 = arith.constant 0 : index
      %c0_6 = arith.constant 0 : index
      %14 = vector.load %arg2[%c0_5, %c0_6] : memref<96x128xf32, #tpu.memory_space<vmem>>, vector<96x128xf32>
      %c0_7 = arith.constant 0 : index
      %c0_8 = arith.constant 0 : index
      %15 = vector.load %arg3[%c0_7, %c0_8] : memref<96x128xf32, #tpu.memory_space<vmem>>, vector<96x128xf32>
      %cst = arith.constant 0.000000e+00 : f32
      %16 = vector.broadcast %cst : f32 to vector<96x128xf32>
      %17 = arith.cmpf ogt, %15, %16 : vector<96x128xf32>
      %c0_i32_9 = arith.constant 0 : i32
      %18 = arith.addi %5, %c0_i32_9 : i32
      %19 = tpu.iota {dimensions = array<i32: 0>} : vector<96x128xi32>
      %20 = vector.broadcast %18 : i32 to vector<96x128xi32>
      %21 = arith.addi %20, %19 : vector<96x128xi32>
      %c68_i32_10 = arith.constant 68 : i32
      %22 = vector.broadcast %c68_i32_10 : i32 to vector<96x128xi32>
      %23 = arith.cmpi slt, %21, %22 : vector<96x128xi32>
      %24 = arith.andi %17, %23 : vector<96x128xi1>
      %cst_11 = arith.constant 1.000000e+00 : f32
      %25 = vector.broadcast %cst_11 : f32 to vector<96x128xf32>
      %26 = arith.select %24, %15, %25 : vector<96x128xi1>, vector<96x128xf32>
      %27 = math.log %26 : vector<96x128xf32>
      %28 = arith.subf %27, %14 : vector<96x128xf32>
      %29 = arith.mulf %15, %28 : vector<96x128xf32>
      %cst_12 = arith.constant 0.000000e+00 : f32
      %30 = vector.broadcast %cst_12 : f32 to vector<96x128xf32>
      %31 = arith.select %24, %29, %30 : vector<96x128xi1>, vector<96x128xf32>
      %32 = vector.shape_cast %31 : vector<96x128xf32> to vector<3x32x128xf32>
      %cst_13 = arith.constant dense<0.000000e+00> : vector<32x128xf32>
      %33 = vector.multi_reduction <add>, %32, %cst_13 [0] : vector<3x32x128xf32> to vector<32x128xf32>
      %34 = arith.addf %13, %33 : vector<32x128xf32>
      %c0_14 = arith.constant 0 : index
      %c0_15 = arith.constant 0 : index
      %35 = vector.load %arg4[%c0_14, %c0_15] : memref<32x128xf32, #tpu.memory_space<vmem>>, vector<32x128xf32>
      tpu.vector_store %arg4[%c0_14, %c0_15], %34 {strides = array<i32>} : memref<32x128xf32, #tpu.memory_space<vmem>>, vector<32x128xf32>,
    } else {
    }
    return
  }
  func.func @transform_0(%arg0: i32, %arg1: i32) -> (i32, i32) {
    %c1_i32 = arith.constant 1 : i32
    %0 = arith.muli %arg0, %c1_i32 : i32
    %1 = arith.addi %0, %arg1 : i32
    %c0_i32 = arith.constant 0 : i32
    %2 = arith.minsi %1, %c0_i32 : i32
    %c0_i32_0 = arith.constant 0 : i32
    %c0_i32_1 = arith.constant 0 : i32
    return %2, %c0_i32_0 : i32, i32
  }
  func.func @transform_1(%arg0: i32, %arg1: i32) -> (i32, i32) {
    %c1_i32 = arith.constant 1 : i32
    %0 = arith.muli %arg0, %c1_i32 : i32
    %1 = arith.addi %0, %arg1 : i32
    %c0_i32 = arith.constant 0 : i32
    %2 = arith.minsi %1, %c0_i32 : i32
    %c0_i32_0 = arith.constant 0 : i32
    %c0_i32_1 = arith.constant 0 : i32
    return %2, %c0_i32_0 : i32, i32
  }
  func.func @transform_2(%arg0: i32, %arg1: i32) -> (i32, i32) {
    %c0_i32 = arith.constant 0 : i32
    %c0_i32_0 = arith.constant 0 : i32
    return %arg0, %c0_i32 : i32, i32
  }
}

</mosaic_0001>

<llo_original>
// kernel: tpu_custom_call.1
$region0: #{tpu_custom_call.1}
  #allocation0 [shape = 'u32[]', space=smem, size = 0x4, offset = 0x4, fixed_abs, tag = 'smem constant byte address 0x4 - core index']
  #allocation1 [shape = 'u32[72,128]{1,0:T(1,128)}', space=vmem, size = 0x9000, scoped, tag = 'internal scratch']
  %s0 = inlined_call_operand.hbm [shape: f32[68,128], index: 0, kind: input, shape index: {}]
  %s1 = inlined_call_operand.hbm [shape: f32[68,128], index: 1, kind: input, shape index: {}]
  %s2 = inlined_call_operand.hbm [shape: f32[32,128], index: 2, kind: output, shape index: {}]
  %s3 = sld [smem:[#allocation0]]
  $region38: #{tpu_custom_call.1} parent=0
    _
  %s5 = ssub.s32 1, %s3
  %s6 = scalar_select 0, %s5, %s3
  $region1: #{tpu_custom_call.1} parent=0
    #allocation2 [shape = 'u8[49152]{0}', space=vmem, size = 0xc000, scoped, tag = 'input window, operand 0, single buffered']
    #allocation3 [shape = 's32[1]{0}', space=sflag, size = 0x4, scoped, tag = 'scoped memory for tpu_custom_call.1']
    #allocation4 [shape = 's32[1]{0}', space=sflag, size = 0x4, scoped, tag = 'scoped memory for tpu_custom_call.1']
    #allocation5 [shape = 'u8[49152]{0}', space=vmem, size = 0xc000, scoped, tag = 'input window, operand 1, single buffered']
    #allocation6 [shape = 's32[1]{0}', space=sflag, size = 0x4, scoped, tag = 'scoped memory for tpu_custom_call.1']
    #allocation7 [shape = 'u8[16384]{0}', space=vmem, size = 0x4000, scoped, tag = 'output window, operand 0, single buffered']
    %7 = vsyncpa [#allocation3], 0
    %8 = vsyncpa [#allocation6], 0
    %9 = vsyncpa [#allocation4], 0
    // Predicated region
    $region2: #{tpu_custom_call.1} parent=1 // pred_check
      _
    $region3: #{tpu_custom_call.1} parent=1 // pred_check_branch
      %11 = sbr.rel (0) target = $region5
    $region4: #{tpu_custom_call.1} parent=1 // pred_region
      %s12 = sadd.s32 0, 0
      %p13 = scmp.lt.s32.totalorder %s12, 0
      %s14 = scalar_select %p13, %s12, 0
      %s15 = smul.u32 12, %s14
      %s16 = ssub.s32 9, %s15
      %s17 = smul.u32 8, %s16
      %s18 = ssub.s32 96, %s17
      %s19 = sshll.u32 %s18, 4
      %20 = vsyncadd [#allocation3], %s19
      %p21 = scmp.ne.s32.totalorder 0, %s17
      %s22 = smul.addr %s15, 8
      %s23 = scalar_lea.hbm %s0, %s22
      %s24 = smul.u32 8, %s16
      %s25 = sshll.u32 %s23, 4
      %s26 = int_to_ptr.hbm [resolvable:$true] %s25
      %s27 = sshll.u32 [#allocation2], 4
      %s28 = int_to_ptr.vmem [resolvable:$true] %s27
      %s29 = sshll.u32 %s24, 4
      %33 = dma.hbm_to_vmem [thread:$0]  (%p21), %s26, %s29, %s28, [#allocation3], 128, 128, 8
    $region5: #{tpu_custom_call.1} parent=1 // pred_fallthru
      _
    // Predicated region
    $region6: #{tpu_custom_call.1} parent=1 // pred_check
      _
    $region7: #{tpu_custom_call.1} parent=1 // pred_check_branch
      %35 = sbr.rel (0) target = $region9
    $region8: #{tpu_custom_call.1} parent=1 // pred_region
      %s36 = sadd.s32 0, 0
      %p37 = scmp.lt.s32.totalorder %s36, 0
      %s38 = scalar_select %p37, %s36, 0
      %s39 = smul.u32 12, %s38
      %s40 = ssub.s32 9, %s39
      %s41 = smul.u32 8, %s40
      %s42 = ssub.s32 96, %s41
      %s43 = sshll.u32 %s42, 4
      %44 = vsyncadd [#allocation6], %s43
      %p45 = scmp.ne.s32.totalorder 0, %s41
      %s46 = smul.addr %s39, 8
      %s47 = scalar_lea.hbm %s1, %s46
      %s48 = smul.u32 8, %s40
      %s49 = sshll.u32 %s47, 4
      %s50 = int_to_ptr.hbm [resolvable:$true] %s49
      %s51 = sshll.u32 [#allocation5], 4
      %s52 = int_to_ptr.vmem [resolvable:$true] %s51
      %s53 = sshll.u32 %s48, 4
      %57 = dma.hbm_to_vmem [thread:$0]  (%p45), %s50, %s53, %s52, [#allocation6], 128, 128, 8
    $region9: #{tpu_custom_call.1} parent=1 // pred_fallthru
      _
    // Predicated region
    $region10: #{tpu_custom_call.1} parent=1 // pred_check
      _
    $region11: #{tpu_custom_call.1} parent=1 // pred_check_branch
      %59 = sbr.rel (0) target = $region13
    $region12: #{tpu_custom_call.1} parent=1 // pred_region
      %61 = dma.done [#allocation3], 1536
    $region13: #{tpu_custom_call.1} parent=1 // pred_fallthru
      _
    // Predicated region
    $region14: #{tpu_custom_call.1} parent=1 // pred_check
      _
    $region15: #{tpu_custom_call.1} parent=1 // pred_check_branch
      %63 = sbr.rel (0) target = $region17
    $region16: #{tpu_custom_call.1} parent=1 // pred_region
      %65 = dma.done [#allocation6], 1536
    $region17: #{tpu_custom_call.1} parent=1 // pred_fallthru
      _
    %s66 = sadd.s32 0, 0
    %p67 = scmp.lt.s32.totalorder %s66, 0
    %s68 = scalar_select %p67, %s66, 0
    %s69 = smul.u32 12, %s68
    %s70 = ssub.s32 9, %s69
    %s71 = smul.u32 8, %s70
    %s72 = sadd.s32 0, 0
    %p73 = scmp.lt.s32.totalorder %s72, 0
    %s74 = scalar_select %p73, %s72, 0
    %s75 = smul.u32 12, %s74
    %s76 = ssub.s32 9, %s75
    %s77 = smul.u32 8, %s76
    %p78 = scmp.eq.s32.totalorder 0, 0
    // Predicated region
    $region18: #{tpu_custom_call.1} parent=1 // pred_check
      %p79 = pneg %p78
    $region19: #{tpu_custom_call.1} parent=1 // pred_check_branch
      %81 = sbr.rel (%p79) target = $region21
    $region20: #{tpu_custom_call.1} parent=1 // pred_region
      %82 = vst [vmem:[#allocation7] sm:$0xff] 0.0
      %83 = vst [vmem:[#allocation7 + $0x8] sm:$0xff] 0.0
      %84 = vst [vmem:[#allocation7 + $0x10] sm:$0xff] 0.0
      %85 = vst [vmem:[#allocation7 + $0x18] sm:$0xff] 0.0
    $region21: #{tpu_custom_call.1} parent=1 // pred_fallthru
      _
    %s86 = sadd.s32 0, 0
    %s87 = smul.u32 %s86, 96
    %s88 = sadd.s32 %s87, 96
    %p89 = scmp.le.s32.totalorder %s88, 68
    // Predicated region
    $region22: #{tpu_custom_call.1} parent=1 // pred_check
      %p90 = pneg %p89
    $region23: #{tpu_custom_call.1} parent=1 // pred_check_branch
      %92 = sbr.rel (%p90) target = $region25
    $region24: #{tpu_custom_call.1} parent=1 // pred_region
      %v93 = vld [vmem:[#allocation7] sm:$0xff]
      %v94 = vld [vmem:[#allocation7 + $0x8] sm:$0xff]
      %v95 = vld [vmem:[#allocation7 + $0x10] sm:$0xff]
      %v96 = vld [vmem:[#allocation7 + $0x18] sm:$0xff]
      %v97 = vld [vmem:[#allocation2] sm:$0xff]
      %v98 = vld [vmem:[#allocation2 + $0x8] sm:$0xff]
      %v99 = vld [vmem:[#allocation2 + $0x10] sm:$0xff]
      %v100 = vld [vmem:[#allocation2 + $0x18] sm:$0xff]
      %v101 = vld [vmem:[#allocation2 + $0x20] sm:$0xff]
      %v102 = vld [vmem:[#allocation2 + $0x28] sm:$0xff]
      %v103 = vld [vmem:[#allocation2 + $0x30] sm:$0xff]
      %v104 = vld [vmem:[#allocation2 + $0x38] sm:$0xff]
      %v105 = vld [vmem:[#allocation2 + $0x40] sm:$0xff]
      %v106 = vld [vmem:[#allocation2 + $0x48] sm:$0xff]
      %v107 = vld [vmem:[#allocation2 + $0x50] sm:$0xff]
      %v108 = vld [vmem:[#allocation2 + $0x58] sm:$0xff]
      %v109 = vld [vmem:[#allocation5] sm:$0xff]
      %v110 = vld [vmem:[#allocation5 + $0x8] sm:$0xff]
      %v111 = vld [vmem:[#allocation5 + $0x10] sm:$0xff]
      %v112 = vld [vmem:[#allocation5 + $0x18] sm:$0xff]
      %v113 = vld [vmem:[#allocation5 + $0x20] sm:$0xff]
      %v114 = vld [vmem:[#allocation5 + $0x28] sm:$0xff]
      %v115 = vld [vmem:[#allocation5 + $0x30] sm:$0xff]
      %v116 = vld [vmem:[#allocation5 + $0x38] sm:$0xff]
      %v117 = vld [vmem:[#allocation5 + $0x40] sm:$0xff]
      %v118 = vld [vmem:[#allocation5 + $0x48] sm:$0xff]
      %v119 = vld [vmem:[#allocation5 + $0x50] sm:$0xff]
      %v120 = vld [vmem:[#allocation5 + $0x58] sm:$0xff]
      %vm121 = vcmp.gt.f32.partialorder %v109, 0.0
      %vm122 = vcmp.gt.f32.partialorder %v110, 0.0
      %vm123 = vcmp.gt.f32.partialorder %v111, 0.0
      %vm124 = vcmp.gt.f32.partialorder %v112, 0.0
      %vm125 = vcmp.gt.f32.partialorder %v113, 0.0
      %vm126 = vcmp.gt.f32.partialorder %v114, 0.0
      %vm127 = vcmp.gt.f32.partialorder %v115, 0.0
      %vm128 = vcmp.gt.f32.partialorder %v116, 0.0
      %vm129 = vcmp.gt.f32.partialorder %v117, 0.0
      %vm130 = vcmp.gt.f32.partialorder %v118, 0.0
      %vm131 = vcmp.gt.f32.partialorder %v119, 0.0
      %vm132 = vcmp.gt.f32.partialorder %v120, 0.0
      %v133 = vsel %vm121, %v109, 1.0
      %v134 = vsel %vm122, %v110, 1.0
      %v135 = vsel %vm123, %v111, 1.0
      %v136 = vsel %vm124, %v112, 1.0
      %v137 = vsel %vm125, %v113, 1.0
      %v138 = vsel %vm126, %v114, 1.0
      %v139 = vsel %vm127, %v115, 1.0
      %v140 = vsel %vm128, %v116, 1.0
      %v141 = vsel %vm129, %v117, 1.0
      %v142 = vsel %vm130, %v118, 1.0
      %v143 = vsel %vm131, %v119, 1.0
      %v144 = vsel %vm132, %v120, 1.0
      %v145 = vlog2.pop %v133
      %v146 = vmul.f32 %v145, 0.6931472
      %v147 = vlog2.pop %v134
      %v148 = vmul.f32 %v147, 0.6931472
      %v149 = vlog2.pop %v135
      %v150 = vmul.f32 %v149, 0.6931472
      %v151 = vlog2.pop %v136
      %v152 = vmul.f32 %v151, 0.6931472
      %v153 = vlog2.pop %v137
      %v154 = vmul.f32 %v153, 0.6931472
      %v155 = vlog2.pop %v138
      %v156 = vmul.f32 %v155, 0.6931472
      %v157 = vlog2.pop %v139
      %v158 = vmul.f32 %v157, 0.6931472
      %v159 = vlog2.pop %v140
      %v160 = vmul.f32 %v159, 0.6931472
      %v161 = vlog2.pop %v141
      %v162 = vmul.f32 %v161, 0.6931472
      %v163 = vlog2.pop %v142
      %v164 = vmul.f32 %v163, 0.6931472
      %v165 = vlog2.pop %v143
      %v166 = vmul.f32 %v165, 0.6931472
      %v167 = vlog2.pop %v144
      %v168 = vmul.f32 %v167, 0.6931472
      %v169 = vsub.f32 %v146, %v97
      %v170 = vsub.f32 %v148, %v98
      %v171 = vsub.f32 %v150, %v99
      %v172 = vsub.f32 %v152, %v100
      %v173 = vsub.f32 %v154, %v101
      %v174 = vsub.f32 %v156, %v102
      %v175 = vsub.f32 %v158, %v103
      %v176 = vsub.f32 %v160, %v104
      %v177 = vsub.f32 %v162, %v105
      %v178 = vsub.f32 %v164, %v106
      %v179 = vsub.f32 %v166, %v107
      %v180 = vsub.f32 %v168, %v108
      %v181 = vmul.f32 %v109, %v169
      %v182 = vmul.f32 %v110, %v170
      %v183 = vmul.f32 %v111, %v171
      %v184 = vmul.f32 %v112, %v172
      %v185 = vmul.f32 %v113, %v173
      %v186 = vmul.f32 %v114, %v174
      %v187 = vmul.f32 %v115, %v175
      %v188 = vmul.f32 %v116, %v176
      %v189 = vmul.f32 %v117, %v177
      %v190 = vmul.f32 %v118, %v178
      %v191 = vmul.f32 %v119, %v179
      %v192 = vmul.f32 %v120, %v180
      %v193 = vsel %vm121, %v181, 0.0
      %v194 = vsel %vm122, %v182, 0.0
      %v195 = vsel %vm123, %v183, 0.0
      %v196 = vsel %vm124, %v184, 0.0
      %v197 = vsel %vm125, %v185, 0.0
      %v198 = vsel %vm126, %v186, 0.0
      %v199 = vsel %vm127, %v187, 0.0
      %v200 = vsel %vm128, %v188, 0.0
      %v201 = vsel %vm129, %v189, 0.0
      %v202 = vsel %vm130, %v190, 0.0
      %v203 = vsel %vm131, %v191, 0.0
      %v204 = vsel %vm132, %v192, 0.0
      %v205 = vadd.f32 %v193, %v197
      %v206 = vadd.f32 %v205, %v201
      %v207 = vadd.f32 %v194, %v198
      %v208 = vadd.f32 %v207, %v202
      %v209 = vadd.f32 %v195, %v199
      %v210 = vadd.f32 %v209, %v203
      %v211 = vadd.f32 %v196, %v200
      %v212 = vadd.f32 %v211, %v204
      %v213 = vadd.f32 %v93, %v206
      %v214 = vadd.f32 %v94, %v208
      %v215 = vadd.f32 %v95, %v210
      %v216 = vadd.f32 %v96, %v212
      %217 = vst [vmem:[#allocation7] sm:$0xff] %v213
      %218 = vst [vmem:[#allocation7 + $0x8] sm:$0xff] %v214
      %219 = vst [vmem:[#allocation7 + $0x10] sm:$0xff] %v215
      %220 = vst [vmem:[#allocation7 + $0x18] sm:$0xff] %v216
    $region25: #{tpu_custom_call.1} parent=1 // pred_fallthru
      _
    %p221 = scmp.gt.s32.totalorder %s88, 68
    // Predicated region
    $region26: #{tpu_custom_call.1} parent=1 // pred_check
      %p222 = pneg %p221
    $region27: #{tpu_custom_call.1} parent=1 // pred_check_branch
      %224 = sbr.rel (%p222) target = $region29
    $region28: #{tpu_custom_call.1} parent=1 // pred_region
      %v225 = vld [vmem:[#allocation7] sm:$0xff]
      %v226 = vld [vmem:[#allocation7 + $0x8] sm:$0xff]
      %v227 = vld [vmem:[#allocation7 + $0x10] sm:$0xff]
      %v228 = vld [vmem:[#allocation7 + $0x18] sm:$0xff]
      %v229 = vld [vmem:[#allocation2] sm:$0xff]
      %v230 = vld [vmem:[#allocation2 + $0x8] sm:$0xff]
      %v231 = vld [vmem:[#allocation2 + $0x10] sm:$0xff]
      %v232 = vld [vmem:[#allocation2 + $0x18] sm:$0xff]
      %v233 = vld [vmem:[#allocation2 + $0x20] sm:$0xff]
      %v234 = vld [vmem:[#allocation2 + $0x28] sm:$0xff]
      %v235 = vld [vmem:[#allocation2 + $0x30] sm:$0xff]
      %v236 = vld [vmem:[#allocation2 + $0x38] sm:$0xff]
      %v237 = vld [vmem:[#allocation2 + $0x40] sm:$0xff]
      %v238 = vld [vmem:[#allocation2 + $0x48] sm:$0xff]
      %v239 = vld [vmem:[#allocation2 + $0x50] sm:$0xff]
      %v240 = vld [vmem:[#allocation2 + $0x58] sm:$0xff]
      %v241 = vld [vmem:[#allocation5] sm:$0xff]
      %v242 = vld [vmem:[#allocation5 + $0x8] sm:$0xff]
      %v243 = vld [vmem:[#allocation5 + $0x10] sm:$0xff]
      %v244 = vld [vmem:[#allocation5 + $0x18] sm:$0xff]
      %v245 = vld [vmem:[#allocation5 + $0x20] sm:$0xff]
      %v246 = vld [vmem:[#allocation5 + $0x28] sm:$0xff]
      %v247 = vld [vmem:[#allocation5 + $0x30] sm:$0xff]
      %v248 = vld [vmem:[#allocation5 + $0x38] sm:$0xff]
      %v249 = vld [vmem:[#allocation5 + $0x40] sm:$0xff]
      %v250 = vld [vmem:[#allocation5 + $0x48] sm:$0xff]
      %v251 = vld [vmem:[#allocation5 + $0x50] sm:$0xff]
      %v252 = vld [vmem:[#allocation5 + $0x58] sm:$0xff]
      %vm253 = vcmp.gt.f32.partialorder %v241, 0.0
      %vm254 = vcmp.gt.f32.partialorder %v242, 0.0
      %vm255 = vcmp.gt.f32.partialorder %v243, 0.0
      %vm256 = vcmp.gt.f32.partialorder %v244, 0.0
      %vm257 = vcmp.gt.f32.partialorder %v245, 0.0
      %vm258 = vcmp.gt.f32.partialorder %v246, 0.0
      %vm259 = vcmp.gt.f32.partialorder %v247, 0.0
      %vm260 = vcmp.gt.f32.partialorder %v248, 0.0
      %vm261 = vcmp.gt.f32.partialorder %v249, 0.0
      %vm262 = vcmp.gt.f32.partialorder %v250, 0.0
      %vm263 = vcmp.gt.f32.partialorder %v251, 0.0
      %vm264 = vcmp.gt.f32.partialorder %v252, 0.0
      %v265 = vlaneseq
      %v266 = vshrl.u32 %v265, 7
      %v267 = vadd.s32 %v266, 8
      %v268 = vadd.s32 %v266, 16
      %v269 = vadd.s32 %v266, 24
      %v270 = vadd.s32 %v266, 32
      %v271 = vadd.s32 %v266, 40
      %v272 = vadd.s32 %v266, 48
      %v273 = vadd.s32 %v266, 56
      %v274 = vadd.s32 %v266, 64
      %v275 = vadd.s32 %v266, 72
      %v276 = vadd.s32 %v266, 80
      %v277 = vadd.s32 %v266, 88
      %v278 = vstv %s87
      %v279 = vadd.s32 %v278, %v266
      %v280 = vadd.s32 %v278, %v267
      %v281 = vadd.s32 %v278, %v268
      %v282 = vadd.s32 %v278, %v269
      %v283 = vadd.s32 %v278, %v270
      %v284 = vadd.s32 %v278, %v271
      %v285 = vadd.s32 %v278, %v272
      %v286 = vadd.s32 %v278, %v273
      %v287 = vadd.s32 %v278, %v274
      %v288 = vadd.s32 %v278, %v275
      %v289 = vadd.s32 %v278, %v276
      %v290 = vadd.s32 %v278, %v277
      %vm291 = vcmp.lt.s32.totalorder %v279, 68
      %vm292 = vcmp.lt.s32.totalorder %v280, 68
      %vm293 = vcmp.lt.s32.totalorder %v281, 68
      %vm294 = vcmp.lt.s32.totalorder %v282, 68
      %vm295 = vcmp.lt.s32.totalorder %v283, 68
      %vm296 = vcmp.lt.s32.totalorder %v284, 68
      %vm297 = vcmp.lt.s32.totalorder %v285, 68
      %vm298 = vcmp.lt.s32.totalorder %v286, 68
      %vm299 = vcmp.lt.s32.totalorder %v287, 68
      %vm300 = vcmp.lt.s32.totalorder %v288, 68
      %vm301 = vcmp.lt.s32.totalorder %v289, 68
      %vm302 = vcmp.lt.s32.totalorder %v290, 68
      %vm303 = vmand %vm253, %vm291
      %vm304 = vmand %vm254, %vm292
      %vm305 = vmand %vm255, %vm293
      %vm306 = vmand %vm256, %vm294
      %vm307 = vmand %vm257, %vm295
      %vm308 = vmand %vm258, %vm296
      %vm309 = vmand %vm259, %vm297
      %vm310 = vmand %vm260, %vm298
      %vm311 = vmand %vm261, %vm299
      %vm312 = vmand %vm262, %vm300
      %vm313 = vmand %vm263, %vm301
      %vm314 = vmand %vm264, %vm302
      %v315 = vsel %vm303, %v241, 1.0
      %v316 = vsel %vm304, %v242, 1.0
      %v317 = vsel %vm305, %v243, 1.0
      %v318 = vsel %vm306, %v244, 1.0
      %v319 = vsel %vm307, %v245, 1.0
      %v320 = vsel %vm308, %v246, 1.0
      %v321 = vsel %vm309, %v247, 1.0
      %v322 = vsel %vm310, %v248, 1.0
      %v323 = vsel %vm311, %v249, 1.0
      %v324 = vsel %vm312, %v250, 1.0
      %v325 = vsel %vm313, %v251, 1.0
      %v326 = vsel %vm314, %v252, 1.0
      %v327 = vlog2.pop %v315
      %v328 = vmul.f32 %v327, 0.6931472
      %v329 = vlog2.pop %v316
      %v330 = vmul.f32 %v329, 0.6931472
      %v331 = vlog2.pop %v317
      %v332 = vmul.f32 %v331, 0.6931472
      %v333 = vlog2.pop %v318
      %v334 = vmul.f32 %v333, 0.6931472
      %v335 = vlog2.pop %v319
      %v336 = vmul.f32 %v335, 0.6931472
      %v337 = vlog2.pop %v320
      %v338 = vmul.f32 %v337, 0.6931472
      %v339 = vlog2.pop %v321
      %v340 = vmul.f32 %v339, 0.6931472
      %v341 = vlog2.pop %v322
      %v342 = vmul.f32 %v341, 0.6931472
      %v343 = vlog2.pop %v323
      %v344 = vmul.f32 %v343, 0.6931472
      %v345 = vlog2.pop %v324
      %v346 = vmul.f32 %v345, 0.6931472
      %v347 = vlog2.pop %v325
      %v348 = vmul.f32 %v347, 0.6931472
      %v349 = vlog2.pop %v326
      %v350 = vmul.f32 %v349, 0.6931472
      %v351 = vsub.f32 %v328, %v229
      %v352 = vsub.f32 %v330, %v230
      %v353 = vsub.f32 %v332, %v231
      %v354 = vsub.f32 %v334, %v232
      %v355 = vsub.f32 %v336, %v233
      %v356 = vsub.f32 %v338, %v234
      %v357 = vsub.f32 %v340, %v235
      %v358 = vsub.f32 %v342, %v236
      %v359 = vsub.f32 %v344, %v237
      %v360 = vsub.f32 %v346, %v238
      %v361 = vsub.f32 %v348, %v239
      %v362 = vsub.f32 %v350, %v240
      %v363 = vmul.f32 %v241, %v351
      %v364 = vmul.f32 %v242, %v352
      %v365 = vmul.f32 %v243, %v353
      %v366 = vmul.f32 %v244, %v354
      %v367 = vmul.f32 %v245, %v355
      %v368 = vmul.f32 %v246, %v356
      %v369 = vmul.f32 %v247, %v357
      %v370 = vmul.f32 %v248, %v358
      %v371 = vmul.f32 %v249, %v359
      %v372 = vmul.f32 %v250, %v360
      %v373 = vmul.f32 %v251, %v361
      %v374 = vmul.f32 %v252, %v362
      %v375 = vsel %vm303, %v363, 0.0
      %v376 = vsel %vm304, %v364, 0.0
      %v377 = vsel %vm305, %v365, 0.0
      %v378 = vsel %vm306, %v366, 0.0
      %v379 = vsel %vm307, %v367, 0.0
      %v380 = vsel %vm308, %v368, 0.0
      %v381 = vsel %vm309, %v369, 0.0
      %v382 = vsel %vm310, %v370, 0.0
      %v383 = vsel %vm311, %v371, 0.0
      %v384 = vsel %vm312, %v372, 0.0
      %v385 = vsel %vm313, %v373, 0.0
      %v386 = vsel %vm314, %v374, 0.0
      %v387 = vadd.f32 %v375, %v379
      %v388 = vadd.f32 %v387, %v383
      %v389 = vadd.f32 %v376, %v380
      %v390 = vadd.f32 %v389, %v384
      %v391 = vadd.f32 %v377, %v381
      %v392 = vadd.f32 %v391, %v385
      %v393 = vadd.f32 %v378, %v382
      %v394 = vadd.f32 %v393, %v386
      %v395 = vadd.f32 %v225, %v388
      %v396 = vadd.f32 %v226, %v390
      %v397 = vadd.f32 %v227, %v392
      %v398 = vadd.f32 %v228, %v394
      %399 = vst [vmem:[#allocation7] sm:$0xff] %v395
      %400 = vst [vmem:[#allocation7 + $0x8] sm:$0xff] %v396
      %401 = vst [vmem:[#allocation7 + $0x10] sm:$0xff] %v397
      %402 = vst [vmem:[#allocation7 + $0x18] sm:$0xff] %v398
    $region29: #{tpu_custom_call.1} parent=1 // pred_fallthru
      _
    // Predicated region
    $region30: #{tpu_custom_call.1} parent=1 // pred_check
      _
    $region31: #{tpu_custom_call.1} parent=1 // pred_check_branch
      %404 = sbr.rel (0) target = $region33
    $region32: #{tpu_custom_call.1} parent=1 // pred_region
      %406 = vsyncadd [#allocation4], 0
      %s407 = sshll.u32 [#allocation7], 4
      %s408 = int_to_ptr.vmem [resolvable:$true] %s407
      %s409 = sshll.u32 %s2, 4
      %s410 = int_to_ptr.hbm [resolvable:$true] %s409
      %415 = dma.vmem_to_hbm [thread:$0]  %s408, 512, %s410, [#allocation4], 128, 128, 8
    $region33: #{tpu_custom_call.1} parent=1 // pred_fallthru
      _
    // Predicated region
    $region34: #{tpu_custom_call.1} parent=1 // pred_check
      _
    $region35: #{tpu_custom_call.1} parent=1 // pred_check_branch
      %417 = sbr.rel (0) target = $region37
    $region36: #{tpu_custom_call.1} parent=1 // pred_region
      %419 = dma.done [#allocation4], 512
    $region37: #{tpu_custom_call.1} parent=1 // pred_fallthru
      _
    %420 = vsyncpa [#allocation3], 1
    %421 = vsyncpa [#allocation6], 1
    %422 = vsyncpa [#allocation4], 1

</llo_original>
